<compile_context>
chip_gen: v7x
topology: tpu7x:2x2x1
jax: 0.10.0
libtpu: 0.0.40
codegen_flags: <defaults>
</compile_context>

<pallas_src>
import functools

import jax
import jax.numpy as jnp
from jax.experimental import pallas as pl
from jax.experimental.pallas import tpu as pltpu


# ------------------------------ Pallas kernel ------------------------------- #

def _outconv_kernel(x_ref, w_ref, b_ref, o_ref):
    # x_ref: (TM, Cin)       one tile of flattened spatial rows
    # w_ref: (Cin, COUT_PAD) weight, Cout zero-padded to a lane-dense 128 mult.
    # b_ref: (1, COUT_PAD)   bias, same padding
    # o_ref: (TM, COUT_PAD)
    o_ref[...] = (
        jnp.dot(x_ref[...], w_ref[...], preferred_element_type=jnp.float32)
        + b_ref[...]
    )


def _round_up(x, m):
    return ((x + m - 1) // m) * m


def out_conv_1x1(x_nchw, w, b, *, tile_m=256):
    """1x1 Conv2d forward. x_nchw: (N, Cin, H, W); w: (Cin, Cout); b: (Cout,)."""
    N, Cin, H, W = x_nchw.shape
    Cout = w.shape[1]
    M = N * H * W

    # Tile over flattened rows; keep the tile sublane-aligned (multiple of 8).
    tile_m = min(tile_m, _round_up(M, 8))
    M_pad = _round_up(M, tile_m)
    cout_pad = _round_up(max(Cout, 128), 128)  # lane-dense output stores

    # Layout glue: NCHW -> (M, Cin) rows; zero-pad rows / output channels.
    x_rows = jnp.transpose(x_nchw, (0, 2, 3, 1)).reshape(M, Cin).astype(jnp.float32)
    if M_pad != M:
        x_rows = jnp.pad(x_rows, ((0, M_pad - M), (0, 0)))
    w_p = jnp.pad(w.astype(jnp.float32), ((0, 0), (0, cout_pad - Cout)))
    b_p = jnp.pad(b.reshape(1, Cout).astype(jnp.float32),
                  ((0, 0), (0, cout_pad - Cout)))

    grid = (M_pad // tile_m,)
    y = pl.pallas_call(
        _outconv_kernel,
        out_shape=jax.ShapeDtypeStruct((M_pad, cout_pad), jnp.float32),
        grid_spec=pltpu.PrefetchScalarGridSpec(
            num_scalar_prefetch=0,
            grid=grid,
            in_specs=[
                pl.BlockSpec((tile_m, Cin), lambda i: (i, 0)),       # row tile
                pl.BlockSpec((Cin, cout_pad), lambda i: (0, 0)),     # weight (resident)
                pl.BlockSpec((1, cout_pad), lambda i: (0, 0)),       # bias   (resident)
            ],
            out_specs=pl.BlockSpec((tile_m, cout_pad), lambda i: (i, 0)),
        ),
        compiler_params=pltpu.CompilerParams(
            # Row tiles are independent -> shard across the 2 TCs on v7x.
            dimension_semantics=("parallel",),
            # Explicit scoped-VMEM budget; tiles here are tiny, but keep the
            # limit below v7x's 64 MiB physical VMEM for portability.
            vmem_limit_bytes=32 * 1024 * 1024,
        ),
    )(x_rows, w_p, b_p)

    # Slice off padding, back to NCHW.
    y = y[:M, :Cout].reshape(N, H, W, Cout)
    return jnp.transpose(y, (0, 3, 1, 2))


# TODO(synk): optional bf16 cast of x/w for the MXU (f32 accumulation) would
# halve HBM traffic on v6e/v7x; kept f32 here to match PyTorch numerics exactly.


# ----------------------------- parameter init ------------------------------- #

def init_outconv_params(key, in_channels, out_channels):
    # Matches nn.Conv2d default init: U(-1/sqrt(fan_in), 1/sqrt(fan_in)).
    kw, kb = jax.random.split(key)
    fan_in = in_channels * 1 * 1
    bound = 1.0 / (fan_in ** 0.5)
    w = jax.random.uniform(kw, (in_channels, out_channels), jnp.float32,
                           -bound, bound)
    b = jax.random.uniform(kb, (out_channels,), jnp.float32, -bound, bound)
    return w, b


# --------------------------------- driver ----------------------------------- #

if __name__ == "__main__":
    key = jax.random.PRNGKey(0)
    kp, kx = jax.random.split(key)

    N, Cin, H, W = 2, 4, 16, 16
    Cout = 3

    w, b = init_outconv_params(kp, Cin, Cout)
    x = jax.random.normal(kx, (N, Cin, H, W), jnp.float32)

    fwd = jax.jit(functools.partial(out_conv_1x1, tile_m=256))
    y = fwd(x, w, b)
    jax.block_until_ready(y)

    assert y.shape == (N, Cout, H, W), y.shape

    # Reference check in plain JAX (high precision).
    ref = jnp.einsum("nchw,co->nohw", x, w,
                     precision=jax.lax.Precision.HIGHEST) + b[None, :, None, None]
    assert jnp.allclose(y, ref, atol=1e-2, rtol=1e-2), float(
        jnp.max(jnp.abs(y - ref)))

    print("KERNEL_OK")
</pallas_src>

<mosaic_0001>
module attributes {stable_mosaic.version = 11 : i64} {
  func.func @_outconv_kernel(%arg0: i32, %arg1: memref<256x4xf32, #tpu.memory_space<vmem>>, %arg2: memref<4x128xf32, #tpu.memory_space<vmem>>, %arg3: memref<1x128xf32, #tpu.memory_space<vmem>>, %arg4: memref<256x128xf32, #tpu.memory_space<vmem>>) attributes {dimension_semantics = [#tpu.dimension_semantics<parallel>], iteration_bounds = array<i64: 2>, scalar_prefetch = 0 : i64, scratch_operands = 0 : i64, tpu.core_type = #tpu.core_type<tc>, window_params = [{transform_indices = @transform_0, window_bounds = array<i64: 256, 4>}, {pipeline_mode = #tpu.pipeline_mode<synchronous>, transform_indices = @transform_1, window_bounds = array<i64: 4, 128>}, {pipeline_mode = #tpu.pipeline_mode<synchronous>, transform_indices = @transform_2, window_bounds = array<i64: 1, 128>}, {transform_indices = @transform_3, window_bounds = array<i64: 256, 128>}]} {
    %c0 = arith.constant 0 : index
    %c0_0 = arith.constant 0 : index
    %0 = vector.load %arg1[%c0, %c0_0] : memref<256x4xf32, #tpu.memory_space<vmem>>, vector<256x4xf32>
    %c0_1 = arith.constant 0 : index
    %c0_2 = arith.constant 0 : index
    %1 = vector.load %arg2[%c0_1, %c0_2] : memref<4x128xf32, #tpu.memory_space<vmem>>, vector<4x128xf32>
    %cst = arith.constant dense<0.000000e+00> : vector<256x128xf32>
    %2 = tpu.matmul %0, %1, %cst {dimension_numbers = #tpu.dot_dimension_numbers<[1], [0], [0], [1], [0, 0, 1, 1], [], []>} : vector<256x4xf32>, vector<4x128xf32>, vector<256x128xf32> -> vector<256x128xf32>
    %c0_3 = arith.constant 0 : index
    %c0_4 = arith.constant 0 : index
    %3 = vector.load %arg3[%c0_3, %c0_4] : memref<1x128xf32, #tpu.memory_space<vmem>>, vector<1x128xf32>
    %4 = vector.broadcast %3 : vector<1x128xf32> to vector<256x128xf32>
    %5 = arith.addf %2, %4 : vector<256x128xf32>
    %c0_5 = arith.constant 0 : index
    %c0_6 = arith.constant 0 : index
    %6 = vector.load %arg4[%c0_5, %c0_6] : memref<256x128xf32, #tpu.memory_space<vmem>>, vector<256x128xf32>
    tpu.vector_store %arg4[%c0_5, %c0_6], %5 {strides = array<i32>} : memref<256x128xf32, #tpu.memory_space<vmem>>, vector<256x128xf32>,
    return
  }
  func.func @transform_0(%arg0: i32) -> (i32, i32) {
    %c0_i32 = arith.constant 0 : i32
    %c0_i32_0 = arith.constant 0 : i32
    return %arg0, %c0_i32 : i32, i32
  }
  func.func @transform_1(%arg0: i32) -> (i32, i32) {
    %c0_i32 = arith.constant 0 : i32
    %c0_i32_0 = arith.constant 0 : i32
    %c0_i32_1 = arith.constant 0 : i32
    return %c0_i32, %c0_i32_0 : i32, i32
  }
  func.func @transform_2(%arg0: i32) -> (i32, i32) {
    %c0_i32 = arith.constant 0 : i32
    %c0_i32_0 = arith.constant 0 : i32
    %c0_i32_1 = arith.constant 0 : i32
    return %c0_i32, %c0_i32_0 : i32, i32
  }
  func.func @transform_3(%arg0: i32) -> (i32, i32) {
    %c0_i32 = arith.constant 0 : i32
    %c0_i32_0 = arith.constant 0 : i32
    return %arg0, %c0_i32 : i32, i32
  }
}

</mosaic_0001>

<llo_original>
// kernel: out_conv_1x1.1
$region0: #{out_conv_1x1.1}
  #allocation0 [shape = 'u32[]', space=smem, size = 0x4, offset = 0x4, fixed_abs, tag = 'smem constant byte address 0x4 - core index']
  #allocation1 [shape = 'u32[144,128]{1,0:T(1,128)}', space=vmem, size = 0x12000, scoped, tag = 'internal scratch']
  %s0 = inlined_call_operand.vmem [shape: f32[512,4], index: 0, kind: input, shape index: {}]
  %s1 = inlined_call_operand.vmem [shape: f32[4,128], index: 1, kind: input, shape index: {}]
  %s2 = inlined_call_operand.vmem [shape: f32[1,128], index: 2, kind: input, shape index: {}]
  %s3 = inlined_call_operand.vmem [shape: f32[512,128], index: 3, kind: output, shape index: {}]
  %s4 = sld [smem:[#allocation0]]
  $region45: #{out_conv_1x1.1} parent=0
    _
  %s6 = ssub.s32 1, %s4
  %s7 = scalar_select 0, %s6, %s4
  loop: start=0, step=1, limit=4
  $region2: #{out_conv_1x1.1} parent=0 // loop_pre_header
    _
  $region3: #{out_conv_1x1.1} parent=0 // loop_header
    %s9 = sphi 0, %s13
    %p10 = scmp.ge.s32.totalorder %s9, 4
    %s19 = sphi 0, %s21
    %s22 = sphi 0, %s19
    %s23 = sphi 0, %s22
    %s39 = sphi 0, %s23
    %s43 = sphi 0, %s43
    %s45 = sphi 0, %s43
    %s46 = sphi 0, %s45
    %s60 = sphi 0, %s46
    %s64 = sphi 0, %s64
    %s66 = sphi 0, %s64
    %s67 = sphi 0, %s66
    %s81 = sphi 0, %s67
    %s87 = sphi 0, %s89
    %s90 = sphi 0, %s87
    %s91 = sphi 0, %s90
    %s107 = sphi 0, %s91
  $region4: #{out_conv_1x1.1} parent=0 // loop_header_branch
    %12 = sbr.rel (%p10) target = $region8
  $region5: #{out_conv_1x1.1} parent=0 // loop_body
    %s14 = ssub.s32 %s9, 1
    %s15 = ssub.s32 %s9, 2
    %s16 = sadd.s32 %s9, 1
    %s17 = ssub.s32 %s9, %s16
    %p18 = scmp.eq.s32.totalorder %s17, 0
    %s20 = sadd.s32 %s19, 1
    %s21 = scalar_select %p18, %s19, %s20
    %p24 = pneg %p18
    %p25 = scmp.eq.s32.totalorder %s9, 1
    %p26 = por %p24, %p25
    %p27 = scmp.ne.s32.totalorder %s19, %s22
    %p28 = scmp.eq.s32.totalorder %s9, 0
    %p29 = por %p27, %p28
    %p30 = scmp.ne.s32.totalorder %s19, %s22
    %p31 = scmp.eq.s32.totalorder %s14, 1
    %p32 = por %p30, %p31
    %p33 = scmp.ne.s32.totalorder %s22, %s23
    %p34 = scmp.eq.s32.totalorder %s14, 0
    %p35 = por %p33, %p34
    %p36 = scmp.ne.s32.totalorder %s22, %s23
    %p37 = scmp.eq.s32.totalorder %s15, 1
    %p38 = por %p36, %p37
    %p40 = scmp.ne.s32.totalorder %s23, %s39
    %p41 = scmp.eq.s32.totalorder %s15, 0
    %p42 = por %p40, %p41
    %s44 = sadd.s32 %s43, 1
    %p47 = scmp.eq.s32.totalorder %s9, 1
    %p48 = scmp.ne.s32.totalorder %s43, %s45
    %p49 = scmp.eq.s32.totalorder %s9, 0
    %p50 = por %p48, %p49
    %p51 = scmp.ne.s32.totalorder %s43, %s45
    %p52 = scmp.eq.s32.totalorder %s14, 1
    %p53 = por %p51, %p52
    %p54 = scmp.ne.s32.totalorder %s45, %s46
    %p55 = scmp.eq.s32.totalorder %s14, 0
    %p56 = por %p54, %p55
    %p57 = scmp.ne.s32.totalorder %s45, %s46
    %p58 = scmp.eq.s32.totalorder %s15, 1
    %p59 = por %p57, %p58
    %p61 = scmp.ne.s32.totalorder %s46, %s60
    %p62 = scmp.eq.s32.totalorder %s15, 0
    %p63 = por %p61, %p62
    %s65 = sadd.s32 %s64, 1
    %p68 = scmp.eq.s32.totalorder %s9, 1
    %p69 = scmp.ne.s32.totalorder %s64, %s66
    %p70 = scmp.eq.s32.totalorder %s9, 0
    %p71 = por %p69, %p70
    %p72 = scmp.ne.s32.totalorder %s64, %s66
    %p73 = scmp.eq.s32.totalorder %s14, 1
    %p74 = por %p72, %p73
    %p75 = scmp.ne.s32.totalorder %s66, %s67
    %p76 = scmp.eq.s32.totalorder %s14, 0
    %p77 = por %p75, %p76
    %p78 = scmp.ne.s32.totalorder %s66, %s67
    %p79 = scmp.eq.s32.totalorder %s15, 1
    %p80 = por %p78, %p79
    %p82 = scmp.ne.s32.totalorder %s67, %s81
    %p83 = scmp.eq.s32.totalorder %s15, 0
    %p84 = por %p82, %p83
    %s85 = ssub.s32 %s9, %s16
    %p86 = scmp.eq.s32.totalorder %s85, 0
    %s88 = sadd.s32 %s87, 1
    %s89 = scalar_select %p86, %s87, %s88
    %p92 = pneg %p86
    %p93 = scmp.eq.s32.totalorder %s9, 1
    %p94 = por %p92, %p93
    %p95 = scmp.ne.s32.totalorder %s87, %s90
    %p96 = scmp.eq.s32.totalorder %s9, 0
    %p97 = por %p95, %p96
    %p98 = scmp.ne.s32.totalorder %s87, %s90
    %p99 = scmp.eq.s32.totalorder %s14, 1
    %p100 = por %p98, %p99
    %p101 = scmp.ne.s32.totalorder %s90, %s91
    %p102 = scmp.eq.s32.totalorder %s14, 0
    %p103 = por %p101, %p102
    %p104 = scmp.ne.s32.totalorder %s90, %s91
    %p105 = scmp.eq.s32.totalorder %s15, 1
    %p106 = por %p104, %p105
    %p108 = scmp.ne.s32.totalorder %s91, %s107
    %p109 = scmp.eq.s32.totalorder %s15, 0
    %p110 = por %p108, %p109
    %p111 = scmp.le.s32.totalorder 1, %s9
    %p112 = scmp.lt.s32.totalorder %s9, 3
    %p113 = pnand %p111, %p112
    %p114 = pneg %p113
    // Predicated region
    $region9: #{out_conv_1x1.1} parent=5 // pred_check
      _
    $region10: #{out_conv_1x1.1} parent=5 // pred_check_branch
      %116 = sbr.rel (%p113) target = $region12
    $region11: #{out_conv_1x1.1} parent=5 // pred_region
      %s117 = ssub.s32 %s9, 1
      // Predicated region
      $region13: #{out_conv_1x1.1} parent=11 // pred_check
        %p118 = pneg %p56
      $region14: #{out_conv_1x1.1} parent=11 // pred_check_branch
        %120 = sbr.rel (%p118) target = $region16
      $region15: #{out_conv_1x1.1} parent=11 // pred_region
        _
      $region16: #{out_conv_1x1.1} parent=11 // pred_fallthru
        _
      // Predicated region
      $region17: #{out_conv_1x1.1} parent=11 // pred_check
        %p121 = pneg %p77
      $region18: #{out_conv_1x1.1} parent=11 // pred_check_branch
        %123 = sbr.rel (%p121) target = $region20
      $region19: #{out_conv_1x1.1} parent=11 // pred_region
        _
      $region20: #{out_conv_1x1.1} parent=11 // pred_fallthru
        _
    $region12: #{out_conv_1x1.1} parent=5 // pred_fallthru
      _
    %p124 = scmp.lt.s32.totalorder %s9, 2
    // Predicated region
    $region21: #{out_conv_1x1.1} parent=5 // pred_check
      %p125 = pneg %p124
    $region22: #{out_conv_1x1.1} parent=5 // pred_check_branch
      %127 = sbr.rel (%p125) target = $region24
    $region23: #{out_conv_1x1.1} parent=5 // pred_region
      // Predicated region
      $region25: #{out_conv_1x1.1} parent=23 // pred_check
        %p128 = pneg %p29
      $region26: #{out_conv_1x1.1} parent=23 // pred_check_branch
        %130 = sbr.rel (%p128) target = $region28
      $region27: #{out_conv_1x1.1} parent=23 // pred_region
        %s131 = smul.u32 32, %s9
        %p132 = scmp.lt.s32.totalorder %s131, 63
        %s133 = scalar_select %p132, %s131, 63
        %s134 = smul.addr %s133, 8
        %s135 = scalar_lea.vmem %s0, %s134
        %s136 = smul.u32 32, %s9
      $region28: #{out_conv_1x1.1} parent=23 // pred_fallthru
        _
    $region24: #{out_conv_1x1.1} parent=5 // pred_fallthru
      _
    %p137 = scmp.le.s32.totalorder 1, %s9
    %p138 = scmp.lt.s32.totalorder %s9, 3
    %p139 = pnand %p137, %p138
    %p140 = pneg %p139
    // Predicated region
    $region29: #{out_conv_1x1.1} parent=5 // pred_check
      _
    $region30: #{out_conv_1x1.1} parent=5 // pred_check_branch
      %142 = sbr.rel (%p139) target = $region32
    $region31: #{out_conv_1x1.1} parent=5 // pred_region
      %s143 = ssub.s32 %s9, 1
      %s144 = smul.u32 32, %s14
      %p145 = scmp.lt.s32.totalorder %s144, 63
      %s146 = scalar_select %p145, %s144, 63
      %s147 = smul.addr %s146, 8
      %s148 = scalar_lea.vmem %s0, %s147
      %p149 = pneg %p35
      %p150 = pneg %p32
      %p151 = pneg %p56
      %p152 = pneg %p53
      %p153 = pneg %p77
      %p154 = pneg %p74
      %p155 = pneg %p103
      %p156 = pneg %p100
      %s157 = smul.u32 32, %s14
      %p158 = scmp.lt.s32.totalorder %s157, 63
      %s159 = scalar_select %p158, %s157, 63
      %s160 = smul.addr %s159, 8
      %s161 = scalar_lea.vmem %s3, %s160
      %s162 = smul.u32 32, %s14
      %p163 = scmp.lt.s32.totalorder %s162, 63
      %s164 = scalar_select %p163, %s162, 63
      %s165 = smul.addr %s164, 8
      %s166 = scalar_lea.vmem %s0, %s165
      %s167 = smul.u32 32, %s14
      %s168 = smul.u32 32, %s14
      %p169 = scmp.lt.s32.totalorder %s168, 63
      %s170 = scalar_select %p169, %s168, 63
      %s171 = smul.addr %s170, 8
      %s172 = scalar_lea.vmem %s3, %s171
      %s173 = smul.u32 32, %s14
      %v174 = vld [vmem:[%s166] sm:$0xff]
      %v175 = vld [vmem:[%s166 + $0x8] sm:$0xff]
      %v176 = vld [vmem:[%s166 + $0x10] sm:$0xff]
      %v177 = vld [vmem:[%s166 + $0x18] sm:$0xff]
      %v178 = vld [vmem:[%s166 + $0x20] sm:$0xff]
      %v179 = vld [vmem:[%s166 + $0x28] sm:$0xff]
      %v180 = vld [vmem:[%s166 + $0x30] sm:$0xff]
      %v181 = vld [vmem:[%s166 + $0x38] sm:$0xff]
      %v182 = vld [vmem:[%s166 + $0x40] sm:$0xff]
      %v183 = vld [vmem:[%s166 + $0x48] sm:$0xff]
      %v184 = vld [vmem:[%s166 + $0x50] sm:$0xff]
      %v185 = vld [vmem:[%s166 + $0x58] sm:$0xff]
      %v186 = vld [vmem:[%s166 + $0x60] sm:$0xff]
      %v187 = vld [vmem:[%s166 + $0x68] sm:$0xff]
      %v188 = vld [vmem:[%s166 + $0x70] sm:$0xff]
      %v189 = vld [vmem:[%s166 + $0x78] sm:$0xff]
      %v190 = vld [vmem:[%s166 + $0x80] sm:$0xff]
      %v191 = vld [vmem:[%s166 + $0x88] sm:$0xff]
      %v192 = vld [vmem:[%s166 + $0x90] sm:$0xff]
      %v193 = vld [vmem:[%s166 + $0x98] sm:$0xff]
      %v194 = vld [vmem:[%s166 + $0xa0] sm:$0xff]
      %v195 = vld [vmem:[%s166 + $0xa8] sm:$0xff]
      %v196 = vld [vmem:[%s166 + $0xb0] sm:$0xff]
      %v197 = vld [vmem:[%s166 + $0xb8] sm:$0xff]
      %v198 = vld [vmem:[%s166 + $0xc0] sm:$0xff]
      %v199 = vld [vmem:[%s166 + $0xc8] sm:$0xff]
      %v200 = vld [vmem:[%s166 + $0xd0] sm:$0xff]
      %v201 = vld [vmem:[%s166 + $0xd8] sm:$0xff]
      %v202 = vld [vmem:[%s166 + $0xe0] sm:$0xff]
      %v203 = vld [vmem:[%s166 + $0xe8] sm:$0xff]
      %v204 = vld [vmem:[%s166 + $0xf0] sm:$0xff]
      %v205 = vld [vmem:[%s166 + $0xf8] sm:$0xff]
      %v206 = vld [vmem:[%s1] sm:$0xf]
      %v207 = vld [vmem:[%s2] sm:$0x1]
      %v209 = vlaneseq
      %v210 = vshrl.u32 %v209, 7
      %v211 = vsub.s32 0, %v210
      %v212 = vrot.slane %v207, %v211
      %vm214 = vcmask 31744
      %v216 = vsel %vm214, %v174, 0
      %v219 = vsel %vm214, %v175, 0
      %v222 = vsel %vm214, %v176, 0
      %v225 = vsel %vm214, %v177, 0
      %v228 = vsel %vm214, %v178, 0
      %v231 = vsel %vm214, %v179, 0
      %v234 = vsel %vm214, %v180, 0
      %v237 = vsel %vm214, %v181, 0
      %v240 = vsel %vm214, %v182, 0
      %v243 = vsel %vm214, %v183, 0
      %v246 = vsel %vm214, %v184, 0
      %v249 = vsel %vm214, %v185, 0
      %v252 = vsel %vm214, %v186, 0
      %v255 = vsel %vm214, %v187, 0
      %v258 = vsel %vm214, %v188, 0
      %v261 = vsel %vm214, %v189, 0
      %v264 = vsel %vm214, %v190, 0
      %v267 = vsel %vm214, %v191, 0
      %v270 = vsel %vm214, %v192, 0
      %v273 = vsel %vm214, %v193, 0
      %v276 = vsel %vm214, %v194, 0
      %v279 = vsel %vm214, %v195, 0
      %v282 = vsel %vm214, %v196, 0
      %v285 = vsel %vm214, %v197, 0
      %v288 = vsel %vm214, %v198, 0
      %v291 = vsel %vm214, %v199, 0
      %v294 = vsel %vm214, %v200, 0
      %v297 = vsel %vm214, %v201, 0
      %v300 = vsel %vm214, %v202, 0
      %v303 = vsel %vm214, %v203, 0
      %v306 = vsel %vm214, %v204, 0
      %v309 = vsel %vm214, %v205, 0
      %vm311 = vcmask 1043456
      %v313 = vsel %vm311, %v206, 0
      %315 = vmatprep.subr.mxu0 0.0
      %316 = vmatpush1.msra.mxu0 %v313
      %317 = vmatprep.subr.mxu0 0.0
      %318 = vmatpush1.msra.mxu0 0.0
      %319 = vmatprep.subr.mxu0 0.0
      %320 = vmatpush1.msra.mxu0 0.0
      %321 = vmatprep.subr.mxu0 0.0
      %322 = vmatpush1.msra.mxu0 0.0
      %323 = vmatprep.subr.mxu0 0.0
      %324 = vmatpush1.msra.mxu0 0.0
      %325 = vmatprep.subr.mxu0 0.0
      %326 = vmatpush1.msra.mxu0 0.0
      %327 = vmatprep.subr.mxu0 0.0
      %328 = vmatpush1.msra.mxu0 0.0
      %329 = vmatprep.subr.mxu0 0.0
      %330 = vmatpush1.msra.mxu0 0.0
      %331 = vmatprep.subr.mxu0 0.0
      %332 = vmatpush1.msra.mxu0 0.0
      %333 = vmatprep.subr.mxu0 0.0
      %334 = vmatpush1.msra.mxu0 0.0
      %335 = vmatprep.subr.mxu0 0.0
      %336 = vmatpush1.msra.mxu0 0.0
      %337 = vmatprep.subr.mxu0 0.0
      %338 = vmatpush1.msra.mxu0 0.0
      %339 = vmatprep.subr.mxu0 0.0
      %340 = vmatpush1.msra.mxu0 0.0
      %341 = vmatprep.subr.mxu0 0.0
      %342 = vmatpush1.msra.mxu0 0.0
      %343 = vmatprep.subr.mxu0 0.0
      %344 = vmatpush1.msra.mxu0 0.0
      %345 = vmatprep.subr.mxu0 0.0
      %346 = vmatpush1.msra.mxu0 0.0
      %347 = vmatprep.subr.mxu0 0.0
      %348 = vmatpush1.msra.mxu0 0.0
      %349 = vmatprep.subr.mxu0 0.0
      %350 = vmatpush1.msra.mxu0 0.0
      %351 = vmatprep.subr.mxu0 0.0
      %352 = vmatpush1.msra.mxu0 0.0
      %353 = vmatprep.subr.mxu0 0.0
      %354 = vmatpush1.msra.mxu0 0.0
      %355 = vmatprep.subr.mxu0 0.0
      %356 = vmatpush1.msra.mxu0 0.0
      %357 = vmatprep.subr.mxu0 0.0
      %358 = vmatpush1.msra.mxu0 0.0
      %359 = vmatprep.subr.mxu0 0.0
      %360 = vmatpush1.msra.mxu0 0.0
      %361 = vmatprep.subr.mxu0 0.0
      %362 = vmatpush1.msra.mxu0 0.0
      %363 = vmatprep.subr.mxu0 0.0
      %364 = vmatpush1.msra.mxu0 0.0
      %365 = vmatprep.subr.mxu0 0.0
      %366 = vmatpush1.msra.mxu0 0.0
      %367 = vmatprep.subr.mxu0 0.0
      %368 = vmatpush1.msra.mxu0 0.0
      %369 = vmatprep.subr.mxu0 0.0
      %370 = vmatpush1.msra.mxu0 0.0
      %371 = vmatprep.subr.mxu0 0.0
      %372 = vmatpush1.msra.mxu0 0.0
      %373 = vmatprep.subr.mxu0 0.0
      %374 = vmatpush1.msra.mxu0 0.0
      %375 = vmatprep.subr.mxu0 0.0
      %376 = vmatpush1.msra.mxu0 0.0
      %377 = vmatprep.subr.mxu0 0.0
      %378 = vmatpush1.msra.mxu0 0.0
      %379 = vmatprep.mubr.f32.mxu0 0.0
      %380 = vmatmul.mubr.f32.gmra.mrb[0].mxu0 %v216
      %v381 = vpop.f32.mrb[0].mxu0
      %v382 = vadd.f32 %v212, %v381
      %v383 = vpop.f32.mrb[0].mxu0
      %384 = vmatprep.mubr.f32.mxu0 0.0
      %385 = vmatmul.mubr.f32.gmra.mrb[0].mxu0 %v219
      %v386 = vpop.f32.mrb[0].mxu0
      %v387 = vadd.f32 %v212, %v386
      %v388 = vpop.f32.mrb[0].mxu0
      %389 = vmatprep.mubr.f32.mxu0 0.0
      %390 = vmatmul.mubr.f32.gmra.mrb[0].mxu0 %v222
      %v391 = vpop.f32.mrb[0].mxu0
      %v392 = vadd.f32 %v212, %v391
      %v393 = vpop.f32.mrb[0].mxu0
      %394 = vmatprep.mubr.f32.mxu0 0.0
      %395 = vmatmul.mubr.f32.gmra.mrb[0].mxu0 %v225
      %v396 = vpop.f32.mrb[0].mxu0
      %v397 = vadd.f32 %v212, %v396
      %v398 = vpop.f32.mrb[0].mxu0
      %399 = vmatprep.mubr.f32.mxu0 0.0
      %400 = vmatmul.mubr.f32.gmra.mrb[0].mxu0 %v228
      %v401 = vpop.f32.mrb[0].mxu0
      %v402 = vadd.f32 %v212, %v401
      %v403 = vpop.f32.mrb[0].mxu0
      %404 = vmatprep.mubr.f32.mxu0 0.0
      %405 = vmatmul.mubr.f32.gmra.mrb[0].mxu0 %v231
      %v406 = vpop.f32.mrb[0].mxu0
      %v407 = vadd.f32 %v212, %v406
      %v408 = vpop.f32.mrb[0].mxu0
      %409 = vmatprep.mubr.f32.mxu0 0.0
      %410 = vmatmul.mubr.f32.gmra.mrb[0].mxu0 %v234
      %v411 = vpop.f32.mrb[0].mxu0
      %v412 = vadd.f32 %v212, %v411
      %v413 = vpop.f32.mrb[0].mxu0
      %414 = vmatprep.mubr.f32.mxu0 0.0
      %415 = vmatmul.mubr.f32.gmra.mrb[0].mxu0 %v237
      %v416 = vpop.f32.mrb[0].mxu0
      %v417 = vadd.f32 %v212, %v416
      %v418 = vpop.f32.mrb[0].mxu0
      %419 = vmatprep.mubr.f32.mxu0 0.0
      %420 = vmatmul.mubr.f32.gmra.mrb[0].mxu0 %v240
      %v421 = vpop.f32.mrb[0].mxu0
      %v422 = vadd.f32 %v212, %v421
      %v423 = vpop.f32.mrb[0].mxu0
      %424 = vmatprep.mubr.f32.mxu0 0.0
      %425 = vmatmul.mubr.f32.gmra.mrb[0].mxu0 %v243
      %v426 = vpop.f32.mrb[0].mxu0
      %v427 = vadd.f32 %v212, %v426
      %v428 = vpop.f32.mrb[0].mxu0
      %429 = vmatprep.mubr.f32.mxu0 0.0
      %430 = vmatmul.mubr.f32.gmra.mrb[0].mxu0 %v246
      %v431 = vpop.f32.mrb[0].mxu0
      %v432 = vadd.f32 %v212, %v431
      %v433 = vpop.f32.mrb[0].mxu0
      %434 = vmatprep.mubr.f32.mxu0 0.0
      %435 = vmatmul.mubr.f32.gmra.mrb[0].mxu0 %v249
      %v436 = vpop.f32.mrb[0].mxu0
      %v437 = vadd.f32 %v212, %v436
      %v438 = vpop.f32.mrb[0].mxu0
      %439 = vmatprep.mubr.f32.mxu0 0.0
      %440 = vmatmul.mubr.f32.gmra.mrb[0].mxu0 %v252
      %v441 = vpop.f32.mrb[0].mxu0
      %v442 = vadd.f32 %v212, %v441
      %v443 = vpop.f32.mrb[0].mxu0
      %444 = vmatprep.mubr.f32.mxu0 0.0
      %445 = vmatmul.mubr.f32.gmra.mrb[0].mxu0 %v255
      %v446 = vpop.f32.mrb[0].mxu0
      %v447 = vadd.f32 %v212, %v446
      %v448 = vpop.f32.mrb[0].mxu0
      %449 = vmatprep.mubr.f32.mxu0 0.0
      %450 = vmatmul.mubr.f32.gmra.mrb[0].mxu0 %v258
      %v451 = vpop.f32.mrb[0].mxu0
      %v452 = vadd.f32 %v212, %v451
      %v453 = vpop.f32.mrb[0].mxu0
      %454 = vmatprep.mubr.f32.mxu0 0.0
      %455 = vmatmul.mubr.f32.gmra.mrb[0].mxu0 %v261
      %v456 = vpop.f32.mrb[0].mxu0
      %v457 = vadd.f32 %v212, %v456
      %v458 = vpop.f32.mrb[0].mxu0
      %459 = vmatprep.mubr.f32.mxu0 0.0
      %460 = vmatmul.mubr.f32.gmra.mrb[0].mxu0 %v264
      %v461 = vpop.f32.mrb[0].mxu0
      %v462 = vadd.f32 %v212, %v461
      %v463 = vpop.f32.mrb[0].mxu0
      %464 = vmatprep.mubr.f32.mxu0 0.0
      %465 = vmatmul.mubr.f32.gmra.mrb[0].mxu0 %v267
      %v466 = vpop.f32.mrb[0].mxu0
      %v467 = vadd.f32 %v212, %v466
      %v468 = vpop.f32.mrb[0].mxu0
      %469 = vmatprep.mubr.f32.mxu0 0.0
      %470 = vmatmul.mubr.f32.gmra.mrb[0].mxu0 %v270
      %v471 = vpop.f32.mrb[0].mxu0
      %v472 = vadd.f32 %v212, %v471
      %v473 = vpop.f32.mrb[0].mxu0
      %474 = vmatprep.mubr.f32.mxu0 0.0
      %475 = vmatmul.mubr.f32.gmra.mrb[0].mxu0 %v273
      %v476 = vpop.f32.mrb[0].mxu0
      %v477 = vadd.f32 %v212, %v476
      %v478 = vpop.f32.mrb[0].mxu0
      %479 = vmatprep.mubr.f32.mxu0 0.0
      %480 = vmatmul.mubr.f32.gmra.mrb[0].mxu0 %v276
      %v481 = vpop.f32.mrb[0].mxu0
      %v482 = vadd.f32 %v212, %v481
      %v483 = vpop.f32.mrb[0].mxu0
      %484 = vmatprep.mubr.f32.mxu0 0.0
      %485 = vmatmul.mubr.f32.gmra.mrb[0].mxu0 %v279
      %v486 = vpop.f32.mrb[0].mxu0
      %v487 = vadd.f32 %v212, %v486
      %v488 = vpop.f32.mrb[0].mxu0
      %489 = vmatprep.mubr.f32.mxu0 0.0
      %490 = vmatmul.mubr.f32.gmra.mrb[0].mxu0 %v282
      %v491 = vpop.f32.mrb[0].mxu0
      %v492 = vadd.f32 %v212, %v491
      %v493 = vpop.f32.mrb[0].mxu0
      %494 = vmatprep.mubr.f32.mxu0 0.0
      %495 = vmatmul.mubr.f32.gmra.mrb[0].mxu0 %v285
      %v496 = vpop.f32.mrb[0].mxu0
      %v497 = vadd.f32 %v212, %v496
      %v498 = vpop.f32.mrb[0].mxu0
      %499 = vmatprep.mubr.f32.mxu0 0.0
      %500 = vmatmul.mubr.f32.gmra.mrb[0].mxu0 %v288
      %v501 = vpop.f32.mrb[0].mxu0
      %v502 = vadd.f32 %v212, %v501
      %v503 = vpop.f32.mrb[0].mxu0
      %504 = vmatprep.mubr.f32.mxu0 0.0
      %505 = vmatmul.mubr.f32.gmra.mrb[0].mxu0 %v291
      %v506 = vpop.f32.mrb[0].mxu0
      %v507 = vadd.f32 %v212, %v506
      %v508 = vpop.f32.mrb[0].mxu0
      %509 = vmatprep.mubr.f32.mxu0 0.0
      %510 = vmatmul.mubr.f32.gmra.mrb[0].mxu0 %v294
      %v511 = vpop.f32.mrb[0].mxu0
      %v512 = vadd.f32 %v212, %v511
      %v513 = vpop.f32.mrb[0].mxu0
      %514 = vmatprep.mubr.f32.mxu0 0.0
      %515 = vmatmul.mubr.f32.gmra.mrb[0].mxu0 %v297
      %v516 = vpop.f32.mrb[0].mxu0
      %v517 = vadd.f32 %v212, %v516
      %v518 = vpop.f32.mrb[0].mxu0
      %519 = vmatprep.mubr.f32.mxu0 0.0
      %520 = vmatmul.mubr.f32.gmra.mrb[0].mxu0 %v300
      %v521 = vpop.f32.mrb[0].mxu0
      %v522 = vadd.f32 %v212, %v521
      %v523 = vpop.f32.mrb[0].mxu0
      %524 = vmatprep.mubr.f32.mxu0 0.0
      %525 = vmatmul.mubr.f32.gmra.mrb[0].mxu0 %v303
      %v526 = vpop.f32.mrb[0].mxu0
      %v527 = vadd.f32 %v212, %v526
      %v528 = vpop.f32.mrb[0].mxu0
      %529 = vmatprep.mubr.f32.mxu0 0.0
      %530 = vmatmul.mubr.f32.gmra.mrb[0].mxu0 %v306
      %v531 = vpop.f32.mrb[0].mxu0
      %v532 = vadd.f32 %v212, %v531
      %v533 = vpop.f32.mrb[0].mxu0
      %534 = vmatprep.mubr.f32.mxu0 0.0
      %535 = vmatmul.mubr.f32.gmra.mrb[0].mxu0 %v309
      %v536 = vpop.f32.mrb[0].mxu0
      %v537 = vadd.f32 %v212, %v536
      %v538 = vpop.f32.mrb[0].mxu0
      %539 = vdwg.mxu0
      %540 = vst [vmem:[%s172] sm:$0xff] %v382
      %541 = vst [vmem:[%s172 + $0x8] sm:$0xff] %v387
      %542 = vst [vmem:[%s172 + $0x10] sm:$0xff] %v392
      %543 = vst [vmem:[%s172 + $0x18] sm:$0xff] %v397
      %544 = vst [vmem:[%s172 + $0x20] sm:$0xff] %v402
      %545 = vst [vmem:[%s172 + $0x28] sm:$0xff] %v407
      %546 = vst [vmem:[%s172 + $0x30] sm:$0xff] %v412
      %547 = vst [vmem:[%s172 + $0x38] sm:$0xff] %v417
      %548 = vst [vmem:[%s172 + $0x40] sm:$0xff] %v422
      %549 = vst [vmem:[%s172 + $0x48] sm:$0xff] %v427
      %550 = vst [vmem:[%s172 + $0x50] sm:$0xff] %v432
      %551 = vst [vmem:[%s172 + $0x58] sm:$0xff] %v437
      %552 = vst [vmem:[%s172 + $0x60] sm:$0xff] %v442
      %553 = vst [vmem:[%s172 + $0x68] sm:$0xff] %v447
      %554 = vst [vmem:[%s172 + $0x70] sm:$0xff] %v452
      %555 = vst [vmem:[%s172 + $0x78] sm:$0xff] %v457
      %556 = vst [vmem:[%s172 + $0x80] sm:$0xff] %v462
      %557 = vst [vmem:[%s172 + $0x88] sm:$0xff] %v467
      %558 = vst [vmem:[%s172 + $0x90] sm:$0xff] %v472
      %559 = vst [vmem:[%s172 + $0x98] sm:$0xff] %v477
      %560 = vst [vmem:[%s172 + $0xa0] sm:$0xff] %v482
      %561 = vst [vmem:[%s172 + $0xa8] sm:$0xff] %v487
      %562 = vst [vmem:[%s172 + $0xb0] sm:$0xff] %v492
      %563 = vst [vmem:[%s172 + $0xb8] sm:$0xff] %v497
      %564 = vst [vmem:[%s172 + $0xc0] sm:$0xff] %v502
      %565 = vst [vmem:[%s172 + $0xc8] sm:$0xff] %v507
      %566 = vst [vmem:[%s172 + $0xd0] sm:$0xff] %v512
      %567 = vst [vmem:[%s172 + $0xd8] sm:$0xff] %v517
      %568 = vst [vmem:[%s172 + $0xe0] sm:$0xff] %v522
      %569 = vst [vmem:[%s172 + $0xe8] sm:$0xff] %v527
      %570 = vst [vmem:[%s172 + $0xf0] sm:$0xff] %v532
      %571 = vst [vmem:[%s172 + $0xf8] sm:$0xff] %v537
      %s572 = smul.u32 32, %s14
      %p573 = scmp.lt.s32.totalorder %s572, 63
      %s574 = scalar_select %p573, %s572, 63
      %s575 = smul.addr %s574, 8
      %s576 = scalar_lea.vmem %s3, %s575
      // Predicated region
      $region33: #{out_conv_1x1.1} parent=31 // pred_check
        %p577 = pneg %p100
      $region34: #{out_conv_1x1.1} parent=31 // pred_check_branch
        %579 = sbr.rel (%p577) target = $region36
      $region35: #{out_conv_1x1.1} parent=31 // pred_region
        %s580 = smul.u32 32, %s14
      $region36: #{out_conv_1x1.1} parent=31 // pred_fallthru
        _
    $region32: #{out_conv_1x1.1} parent=5 // pred_fallthru
      _
    %p581 = scmp.le.s32.totalorder 2, %s9
    // Predicated region
    $region37: #{out_conv_1x1.1} parent=5 // pred_check
      %p582 = pneg %p581
    $region38: #{out_conv_1x1.1} parent=5 // pred_check_branch
      %584 = sbr.rel (%p582) target = $region40
    $region39: #{out_conv_1x1.1} parent=5 // pred_region
      %s585 = ssub.s32 %s9, 2
      // Predicated region
      $region41: #{out_conv_1x1.1} parent=39 // pred_check
        %p586 = pneg %p106
      $region42: #{out_conv_1x1.1} parent=39 // pred_check_branch
        %588 = sbr.rel (%p586) target = $region44
      $region43: #{out_conv_1x1.1} parent=39 // pred_region
        %s589 = smul.u32 32, %s15
        %p590 = scmp.lt.s32.totalorder %s589, 63
        %s591 = scalar_select %p590, %s589, 63
        %s592 = smul.addr %s591, 8
        %s593 = scalar_lea.vmem %s3, %s592
      $region44: #{out_conv_1x1.1} parent=39 // pred_fallthru
        _
    $region40: #{out_conv_1x1.1} parent=5 // pred_fallthru
      _
  $region6: #{out_conv_1x1.1} parent=0 // loop_footer
    %s13 = sadd.s32 1, %s9
  $region7: #{out_conv_1x1.1} parent=0 // loop_footer_branch
    %8 = sbr.rel target = $region3
  $region8: #{out_conv_1x1.1} parent=0 // loop_exit
    _

</llo_original>
